<compile_context>
chip_gen: v7x
topology: tpu7x:2x2x1
jax: 0.10.0
libtpu: 0.0.40
codegen_flags: <defaults>
</compile_context>

<pallas_src>
import math

import jax
import jax.numpy as jnp
from jax import lax
from jax.experimental import pallas as pl
from jax.experimental.pallas import tpu as pltpu


def _round_up(x, m):
    return ((x + m - 1) // m) * m


def make_double_q_kernel(n_hidden):
    """Fused (q1 || q2) MLP kernel with lane-dense [2, tb] output.

    refs layout:
      refs[0]  : state block   [tb, obs_dim]   (f32)
      refs[1]  : action block  [tb, act_dim]   (f32)
      refs[2]  : W0_s          [obs_dim, 2H]   (param_dtype)
      refs[3]  : W0_a          [act_dim, 2H]   (param_dtype)
      refs[4]  : b0            [1, 2H]         (f32)
      refs[5 : 5+2*n_hidden]   : (Wi, bi) hidden layers, Wi [2H,2H], bi [1,2H]
      refs[-3] : W_out^T       [2, 2H]         (param_dtype)
      refs[-2] : b_out         [2, 1]          (f32)
      refs[-1] : out block     [2, tb]         (f32)
    """

    def kernel(*refs):
        s_ref, a_ref, w0s_ref, w0a_ref, b0_ref = refs[:5]
        hidden = refs[5:5 + 2 * n_hidden]
        wT_ref, bT_ref = refs[5 + 2 * n_hidden], refs[6 + 2 * n_hidden]
        out_ref = refs[-1]

        dt = w0s_ref.dtype

        # Layer 0: the s_a concat is fused into two matmuls on one accumulator.
        h = (jnp.dot(s_ref[...].astype(dt), w0s_ref[...],
                     preferred_element_type=jnp.float32)
             + jnp.dot(a_ref[...].astype(dt), w0a_ref[...],
                       preferred_element_type=jnp.float32)
             + b0_ref[...])
        h = jnp.maximum(h, 0.0)                       # ReLU, f32 (v5e-safe)

        # Hidden layers (block-diagonal packed weights).
        for i in range(n_hidden):
            w = hidden[2 * i][...]                    # [2H, 2H]
            b = hidden[2 * i + 1][...]                # [1, 2H]
            h = jnp.dot(h.astype(w.dtype), w,
                        preferred_element_type=jnp.float32) + b
            h = jnp.maximum(h, 0.0)

        # Final layer, lane-dense: contract 2H of W_out^T [2,2H] with 2H of
        # h [tb,2H] -> q [2, tb]; batch stays on the lane axis for the store.
        q = lax.dot_general(
            wT_ref[...], h.astype(wT_ref.dtype),
            dimension_numbers=(((1,), (1,)), ((), ())),
            preferred_element_type=jnp.float32)       # [2, tb]
        q = q + bT_ref[...]                           # [2, 1] broadcasts on lanes
        out_ref[...] = q.astype(out_ref.dtype)

    return kernel


def pack_double_q_params(q1_params, q2_params, obs_dim,
                         param_dtype=jnp.bfloat16):
    """Fuse q1/q2 per-layer weights into a single 2x-wide packed MLP.

    Returns ((W0_s, W0_a, b0), [(Wi, bi) ...hidden...], (W_out^T, b_out_col)).
    """
    assert len(q1_params) == len(q2_params) >= 2
    # Layer 0: shared input -> concatenate output columns, split rows by
    # state/action so the kernel never needs the concatenated s_a.
    (w1_0, b1_0), (w2_0, b2_0) = q1_params[0], q2_params[0]
    w0 = jnp.concatenate([w1_0, w2_0], axis=1)                   # [in, 2H]
    w0_s = w0[:obs_dim].astype(param_dtype)                      # [obs, 2H]
    w0_a = w0[obs_dim:].astype(param_dtype)                      # [act, 2H]
    b0 = jnp.concatenate([b1_0, b2_0], axis=1).astype(jnp.float32)

    hidden = []
    for (w1, b1), (w2, b2) in zip(q1_params[1:-1], q2_params[1:-1]):
        z12 = jnp.zeros((w1.shape[0], w2.shape[1]), jnp.float32)
        z21 = jnp.zeros((w2.shape[0], w1.shape[1]), jnp.float32)
        w = jnp.block([[w1, z12], [z21, w2]]).astype(param_dtype)  # [2H, 2H]
        b = jnp.concatenate([b1, b2], axis=1).astype(jnp.float32)  # [1, 2H]
        hidden.append((w, b))

    # Final layer: block-diag, stored transposed -> [2, 2H]; bias as column.
    (w1_L, b1_L), (w2_L, b2_L) = q1_params[-1], q2_params[-1]
    w_out_t = jnp.block(
        [[w1_L.T, jnp.zeros_like(w2_L).T],
         [jnp.zeros_like(w1_L).T, w2_L.T]]).astype(param_dtype)    # [2, 2H]
    b_out = jnp.concatenate([b1_L, b2_L], axis=1).T.astype(jnp.float32)  # [2,1]

    return (w0_s, w0_a, b0), hidden, (w_out_t, b_out)


def double_q_forward(state, action, q1_params, q2_params, *,
                     param_dtype=jnp.bfloat16, block_batch=512):
    """DoubleQCritic.forward: returns q1q2 of shape [2, B]."""
    state = jnp.asarray(state, jnp.float32)
    action = jnp.asarray(action, jnp.float32)
    if state.ndim == 1:
        state = state[None, :]
    if action.ndim == 1:
        action = action[None, :]
    B, obs_dim = state.shape
    _, act_dim = action.shape

    (w0_s, w0_a, b0), hidden, (w_out_t, b_out) = pack_double_q_params(
        q1_params, q2_params, obs_dim, param_dtype)
    n_hidden = len(hidden)

    # Tile choice: single fat step when the batch fits (no padding, blocks ==
    # full array dims); otherwise 128/256-multiple tiles (lane-dense output,
    # MXU-friendly M, >=2 grid steps for v7x megacore on large batches).
    assert block_batch % 128 == 0
    if B <= block_batch:
        tb, Bp = B, B
    else:
        tb = block_batch
        Bp = _round_up(B, tb)
        state = jnp.pad(state, ((0, Bp - B), (0, 0)))
        action = jnp.pad(action, ((0, Bp - B), (0, 0)))
    grid = (Bp // tb,)

    const = lambda i: (0, 0)     # weights/biases stay resident in VMEM
    flat_inputs = [state, action, w0_s, w0_a, b0]
    in_specs = [pl.BlockSpec((tb, obs_dim), lambda i: (i, 0)),
                pl.BlockSpec((tb, act_dim), lambda i: (i, 0)),
                pl.BlockSpec(w0_s.shape, const),
                pl.BlockSpec(w0_a.shape, const),
                pl.BlockSpec(b0.shape, const)]
    for (w, b) in hidden:
        flat_inputs += [w, b]
        in_specs += [pl.BlockSpec(w.shape, const), pl.BlockSpec(b.shape, const)]
    flat_inputs += [w_out_t, b_out]
    in_specs += [pl.BlockSpec(w_out_t.shape, const),
                 pl.BlockSpec(b_out.shape, const)]

    # Lane-dense output: [2, Bp], block (2, tb), batch axis on lanes.
    out_spec = pl.BlockSpec((2, tb), lambda i: (0, i))

    w_elems = (w0_s.size + w0_a.size + sum(w.size for w, _ in hidden)
               + w_out_t.size)
    flops = 2 * Bp * w_elems
    bytes_accessed = (state.size * 4 + action.size * 4
                      + sum(x.size * x.dtype.itemsize for x in flat_inputs[2:])
                      + 2 * Bp * 4)

    out = pl.pallas_call(
        make_double_q_kernel(n_hidden),
        out_shape=jax.ShapeDtypeStruct((2, Bp), jnp.float32),
        grid_spec=pltpu.PrefetchScalarGridSpec(
            num_scalar_prefetch=0,
            grid=grid,
            in_specs=in_specs,
            out_specs=out_spec,
        ),
        compiler_params=pltpu.CompilerParams(
            dimension_semantics=("parallel",)),
        cost_estimate=pl.CostEstimate(
            flops=flops, transcendentals=0, bytes_accessed=bytes_accessed),
    )(*flat_inputs)

    return out[:, :B]            # [2, B]: row0 = q1(s,a), row1 = q2(s,a)


def init_mlp_params(key, network_sizes):
    """PyTorch nn.Linear-style init: U(-1/sqrt(fan_in), 1/sqrt(fan_in)).

    Returns list of (W [in, out], b [1, out]) — W transposed vs. nn.Linear.
    """
    params = []
    for in_dim, out_dim in zip(network_sizes[:-1], network_sizes[1:]):
        key, kw, kb = jax.random.split(key, 3)
        bound = 1.0 / math.sqrt(in_dim)
        w = jax.random.uniform(kw, (in_dim, out_dim), jnp.float32, -bound, bound)
        b = jax.random.uniform(kb, (1, out_dim), jnp.float32, -bound, bound)
        params.append((w, b))
    return params, key


def reference_forward(state, action, q1_params, q2_params):
    """Pure-JAX f32 reference (matches the PyTorch forward)."""
    s_a = jnp.concatenate([state, action], axis=-1)
    if s_a.ndim == 1:
        s_a = s_a[None, :]

    def mlp(x, params):
        h = x
        for i, (w, b) in enumerate(params):
            h = h @ w + b
            if i < len(params) - 1:
                h = jnp.maximum(h, 0.0)
        return h

    q1 = mlp(s_a, q1_params)[:, 0]
    q2 = mlp(s_a, q2_params)[:, 0]
    return jnp.stack([q1, q2])   # [2, B]


if __name__ == "__main__":
    # SAC-style sizes: obs_dim=32, act_dim=8 -> in_dim=40, hidden 64/64, Q out 1.
    obs_dim, act_dim = 32, 8
    network_sizes = (obs_dim + act_dim, 64, 64, 1)

    key = jax.random.PRNGKey(0)
    q1_params, key = init_mlp_params(key, network_sizes)
    q2_params, key = init_mlp_params(key, network_sizes)

    # Case 1: small batch -> single grid step, no padding, no wrapper concat.
    batch = 100
    key, ks, ka = jax.random.split(key, 3)
    state = jax.random.normal(ks, (batch, obs_dim), jnp.float32)
    action = jax.random.normal(ka, (batch, act_dim), jnp.float32)

    q1q2 = double_q_forward(state, action, q1_params, q2_params)
    jax.block_until_ready(q1q2)
    ref = reference_forward(state, action, q1_params, q2_params)
    assert q1q2.shape == (2, batch)
    max_err = float(jnp.max(jnp.abs(q1q2 - ref)))
    # bf16 MXU inputs vs f32 reference -> loosened tolerance.
    assert jnp.allclose(q1q2, ref, atol=5e-2, rtol=5e-2), max_err
    assert bool(jnp.all(jnp.isfinite(q1q2)))

    # Case 2: multi-step grid (tb=128, padded batch) to exercise pipelining.
    batch2 = 300
    key, ks2, ka2 = jax.random.split(key, 3)
    state2 = jax.random.normal(ks2, (batch2, obs_dim), jnp.float32)
    action2 = jax.random.normal(ka2, (batch2, act_dim), jnp.float32)

    q1q2_2 = double_q_forward(state2, action2, q1_params, q2_params,
                              block_batch=128)
    jax.block_until_ready(q1q2_2)
    ref2 = reference_forward(state2, action2, q1_params, q2_params)
    assert q1q2_2.shape == (2, batch2)
    assert jnp.allclose(q1q2_2, ref2, atol=5e-2, rtol=5e-2)
    assert bool(jnp.all(jnp.isfinite(q1q2_2)))

    print("KERNEL_OK")
</pallas_src>

<mosaic_0001>
module attributes {stable_mosaic.version = 11 : i64} {
  func.func @kernel(%arg0: i32, %arg1: memref<100x32xf32, #tpu.memory_space<vmem>>, %arg2: memref<100x8xf32, #tpu.memory_space<vmem>>, %arg3: memref<32x128xbf16, #tpu.memory_space<vmem>>, %arg4: memref<8x128xbf16, #tpu.memory_space<vmem>>, %arg5: memref<1x128xf32, #tpu.memory_space<vmem>>, %arg6: memref<128x128xbf16, #tpu.memory_space<vmem>>, %arg7: memref<1x128xf32, #tpu.memory_space<vmem>>, %arg8: memref<2x128xbf16, #tpu.memory_space<vmem>>, %arg9: memref<2x1xf32, #tpu.memory_space<vmem>>, %arg10: memref<2x100xf32, #tpu.memory_space<vmem>>) attributes {dimension_semantics = [#tpu.dimension_semantics<parallel>], iteration_bounds = array<i64: 1>, scalar_prefetch = 0 : i64, scratch_operands = 0 : i64, tpu.core_type = #tpu.core_type<tc>, window_params = [{transform_indices = @transform_0, window_bounds = array<i64: 100, 32>}, {transform_indices = @transform_1, window_bounds = array<i64: 100, 8>}, {pipeline_mode = #tpu.pipeline_mode<synchronous>, transform_indices = @transform_2, window_bounds = array<i64: 32, 128>}, {pipeline_mode = #tpu.pipeline_mode<synchronous>, transform_indices = @transform_3, window_bounds = array<i64: 8, 128>}, {pipeline_mode = #tpu.pipeline_mode<synchronous>, transform_indices = @transform_4, window_bounds = array<i64: 1, 128>}, {pipeline_mode = #tpu.pipeline_mode<synchronous>, transform_indices = @transform_5, window_bounds = array<i64: 128, 128>}, {pipeline_mode = #tpu.pipeline_mode<synchronous>, transform_indices = @transform_6, window_bounds = array<i64: 1, 128>}, {pipeline_mode = #tpu.pipeline_mode<synchronous>, transform_indices = @transform_7, window_bounds = array<i64: 2, 128>}, {pipeline_mode = #tpu.pipeline_mode<synchronous>, transform_indices = @transform_8, window_bounds = array<i64: 2, 1>}, {transform_indices = @transform_9, window_bounds = array<i64: 2, 100>}]} {
    %c0 = arith.constant 0 : index
    %c0_0 = arith.constant 0 : index
    %0 = vector.load %arg1[%c0, %c0_0] : memref<100x32xf32, #tpu.memory_space<vmem>>, vector<100x32xf32>
    %1 = arith.truncf %0 : vector<100x32xf32> to vector<100x32xbf16>
    %c0_1 = arith.constant 0 : index
    %c0_2 = arith.constant 0 : index
    %2 = vector.load %arg3[%c0_1, %c0_2] : memref<32x128xbf16, #tpu.memory_space<vmem>>, vector<32x128xbf16>
    %cst = arith.constant dense<0.000000e+00> : vector<100x128xf32>
    %3 = tpu.matmul %1, %2, %cst {dimension_numbers = #tpu.dot_dimension_numbers<[1], [0], [0], [1], [0, 0, 1, 1], [], []>} : vector<100x32xbf16>, vector<32x128xbf16>, vector<100x128xf32> -> vector<100x128xf32>
    %c0_3 = arith.constant 0 : index
    %c0_4 = arith.constant 0 : index
    %4 = vector.load %arg2[%c0_3, %c0_4] : memref<100x8xf32, #tpu.memory_space<vmem>>, vector<100x8xf32>
    %5 = arith.truncf %4 : vector<100x8xf32> to vector<100x8xbf16>
    %c0_5 = arith.constant 0 : index
    %c0_6 = arith.constant 0 : index
    %6 = vector.load %arg4[%c0_5, %c0_6] : memref<8x128xbf16, #tpu.memory_space<vmem>>, vector<8x128xbf16>
    %cst_7 = arith.constant dense<0.000000e+00> : vector<100x128xf32>
    %7 = tpu.matmul %5, %6, %cst_7 {dimension_numbers = #tpu.dot_dimension_numbers<[1], [0], [0], [1], [0, 0, 1, 1], [], []>} : vector<100x8xbf16>, vector<8x128xbf16>, vector<100x128xf32> -> vector<100x128xf32>
    %8 = arith.addf %3, %7 : vector<100x128xf32>
    %c0_8 = arith.constant 0 : index
    %c0_9 = arith.constant 0 : index
    %9 = vector.load %arg5[%c0_8, %c0_9] : memref<1x128xf32, #tpu.memory_space<vmem>>, vector<1x128xf32>
    %10 = vector.broadcast %9 : vector<1x128xf32> to vector<100x128xf32>
    %11 = arith.addf %8, %10 : vector<100x128xf32>
    %cst_10 = arith.constant 0.000000e+00 : f32
    %12 = vector.broadcast %cst_10 : f32 to vector<100x128xf32>
    %13 = arith.maximumf %11, %12 : vector<100x128xf32>
    %c0_11 = arith.constant 0 : index
    %c0_12 = arith.constant 0 : index
    %14 = vector.load %arg6[%c0_11, %c0_12] : memref<128x128xbf16, #tpu.memory_space<vmem>>, vector<128x128xbf16>
    %c0_13 = arith.constant 0 : index
    %c0_14 = arith.constant 0 : index
    %15 = vector.load %arg7[%c0_13, %c0_14] : memref<1x128xf32, #tpu.memory_space<vmem>>, vector<1x128xf32>
    %16 = arith.truncf %13 : vector<100x128xf32> to vector<100x128xbf16>
    %cst_15 = arith.constant dense<0.000000e+00> : vector<100x128xf32>
    %17 = tpu.matmul %16, %14, %cst_15 {dimension_numbers = #tpu.dot_dimension_numbers<[1], [0], [0], [1], [0, 0, 1, 1], [], []>} : vector<100x128xbf16>, vector<128x128xbf16>, vector<100x128xf32> -> vector<100x128xf32>
    %18 = vector.broadcast %15 : vector<1x128xf32> to vector<100x128xf32>
    %19 = arith.addf %17, %18 : vector<100x128xf32>
    %cst_16 = arith.constant 0.000000e+00 : f32
    %20 = vector.broadcast %cst_16 : f32 to vector<100x128xf32>
    %21 = arith.maximumf %19, %20 : vector<100x128xf32>
    %c0_17 = arith.constant 0 : index
    %c0_18 = arith.constant 0 : index
    %22 = vector.load %arg8[%c0_17, %c0_18] : memref<2x128xbf16, #tpu.memory_space<vmem>>, vector<2x128xbf16>
    %23 = arith.truncf %21 : vector<100x128xf32> to vector<100x128xbf16>
    %cst_19 = arith.constant dense<0.000000e+00> : vector<2x100xf32>
    %24 = tpu.matmul %22, %23, %cst_19 {dimension_numbers = #tpu.dot_dimension_numbers<[1], [1], [0], [0], [0, 0, 1, 0], [], []>} : vector<2x128xbf16>, vector<100x128xbf16>, vector<2x100xf32> -> vector<2x100xf32>
    %c0_20 = arith.constant 0 : index
    %c0_21 = arith.constant 0 : index
    %25 = vector.load %arg9[%c0_20, %c0_21] : memref<2x1xf32, #tpu.memory_space<vmem>>, vector<2x1xf32>
    %26 = vector.broadcast %25 : vector<2x1xf32> to vector<2x100xf32>
    %27 = arith.addf %24, %26 : vector<2x100xf32>
    %c0_22 = arith.constant 0 : index
    %c0_23 = arith.constant 0 : index
    %28 = vector.load %arg10[%c0_22, %c0_23] : memref<2x100xf32, #tpu.memory_space<vmem>>, vector<2x100xf32>
    tpu.vector_store %arg10[%c0_22, %c0_23], %27 {strides = array<i32>} : memref<2x100xf32, #tpu.memory_space<vmem>>, vector<2x100xf32>,
    return
  }
  func.func @transform_0(%arg0: i32) -> (i32, i32) {
    %c0_i32 = arith.constant 0 : i32
    %c0_i32_0 = arith.constant 0 : i32
    return %arg0, %c0_i32 : i32, i32
  }
  func.func @transform_1(%arg0: i32) -> (i32, i32) {
    %c0_i32 = arith.constant 0 : i32
    %c0_i32_0 = arith.constant 0 : i32
    return %arg0, %c0_i32 : i32, i32
  }
  func.func @transform_2(%arg0: i32) -> (i32, i32) {
    %c0_i32 = arith.constant 0 : i32
    %c0_i32_0 = arith.constant 0 : i32
    %c0_i32_1 = arith.constant 0 : i32
    return %c0_i32, %c0_i32_0 : i32, i32
  }
  func.func @transform_3(%arg0: i32) -> (i32, i32) {
    %c0_i32 = arith.constant 0 : i32
    %c0_i32_0 = arith.constant 0 : i32
    %c0_i32_1 = arith.constant 0 : i32
    return %c0_i32, %c0_i32_0 : i32, i32
  }
  func.func @transform_4(%arg0: i32) -> (i32, i32) {
    %c0_i32 = arith.constant 0 : i32
    %c0_i32_0 = arith.constant 0 : i32
    %c0_i32_1 = arith.constant 0 : i32
    return %c0_i32, %c0_i32_0 : i32, i32
  }
  func.func @transform_5(%arg0: i32) -> (i32, i32) {
    %c0_i32 = arith.constant 0 : i32
    %c0_i32_0 = arith.constant 0 : i32
    %c0_i32_1 = arith.constant 0 : i32
    return %c0_i32, %c0_i32_0 : i32, i32
  }
  func.func @transform_6(%arg0: i32) -> (i32, i32) {
    %c0_i32 = arith.constant 0 : i32
    %c0_i32_0 = arith.constant 0 : i32
    %c0_i32_1 = arith.constant 0 : i32
    return %c0_i32, %c0_i32_0 : i32, i32
  }
  func.func @transform_7(%arg0: i32) -> (i32, i32) {
    %c0_i32 = arith.constant 0 : i32
    %c0_i32_0 = arith.constant 0 : i32
    %c0_i32_1 = arith.constant 0 : i32
    return %c0_i32, %c0_i32_0 : i32, i32
  }
  func.func @transform_8(%arg0: i32) -> (i32, i32) {
    %c0_i32 = arith.constant 0 : i32
    %c0_i32_0 = arith.constant 0 : i32
    %c0_i32_1 = arith.constant 0 : i32
    return %c0_i32, %c0_i32_0 : i32, i32
  }
  func.func @transform_9(%arg0: i32) -> (i32, i32) {
    %c0_i32 = arith.constant 0 : i32
    %c0_i32_0 = arith.constant 0 : i32
    return %c0_i32, %arg0 : i32, i32
  }
}

</mosaic_0001>

<llo_original>
// kernel: tpu_custom_call.1
$region0: #{tpu_custom_call.1}
  #allocation0 [shape = 'u32[]', space=smem, size = 0x4, offset = 0x4, fixed_abs, tag = 'smem constant byte address 0x4 - core index']
  #allocation1 [shape = 'u32[144,128]{1,0:T(1,128)}', space=vmem, size = 0x12000, scoped, tag = 'internal scratch']
  %s0 = inlined_call_operand.vmem [shape: f32[100,32], index: 0, kind: input, shape index: {}]
  %s1 = inlined_call_operand.vmem [shape: f32[100,8], index: 1, kind: input, shape index: {}]
  %s2 = inlined_call_operand.vmem [shape: bf16[32,128], index: 2, kind: input, shape index: {}]
  %s3 = inlined_call_operand.vmem [shape: bf16[8,128], index: 3, kind: input, shape index: {}]
  %s4 = inlined_call_operand.vmem [shape: f32[1,128], index: 4, kind: input, shape index: {}]
  %s5 = inlined_call_operand.vmem [shape: bf16[128,128], index: 5, kind: input, shape index: {}]
  %s6 = inlined_call_operand.vmem [shape: f32[1,128], index: 6, kind: input, shape index: {}]
  %s7 = inlined_call_operand.vmem [shape: bf16[2,128], index: 7, kind: input, shape index: {}]
  %s8 = inlined_call_operand.vmem [shape: f32[2,1], index: 8, kind: input, shape index: {}]
  %s9 = inlined_call_operand.hbm [shape: f32[2,100], index: 9, kind: output, shape index: {}]
  %s10 = sld [smem:[#allocation0]]
  $region46: #{tpu_custom_call.1} parent=0
    _
  %s12 = ssub.s32 1, %s10
  %s13 = scalar_select 0, %s12, %s10
  $region1: #{tpu_custom_call.1} parent=0
    #allocation2 [shape = 'u8[1024]{0}', space=vmem, size = 0x400, scoped, tag = 'output window, operand 0, single buffered']
    #allocation3 [shape = 's32[1]{0}', space=sflag, size = 0x4, scoped, tag = 'scoped memory for tpu_custom_call.1']
    %14 = vsyncpa [#allocation3], 0
    // Predicated region
    $region2: #{tpu_custom_call.1} parent=1 // pred_check
      _
    $region3: #{tpu_custom_call.1} parent=1 // pred_check_branch
      %16 = sbr.rel (0) target = $region5
    $region4: #{tpu_custom_call.1} parent=1 // pred_region
      _
    $region5: #{tpu_custom_call.1} parent=1 // pred_fallthru
      _
    // Predicated region
    $region6: #{tpu_custom_call.1} parent=1 // pred_check
      _
    $region7: #{tpu_custom_call.1} parent=1 // pred_check_branch
      %18 = sbr.rel (0) target = $region9
    $region8: #{tpu_custom_call.1} parent=1 // pred_region
      _
    $region9: #{tpu_custom_call.1} parent=1 // pred_fallthru
      _
    // Predicated region
    $region10: #{tpu_custom_call.1} parent=1 // pred_check
      _
    $region11: #{tpu_custom_call.1} parent=1 // pred_check_branch
      %20 = sbr.rel (0) target = $region13
    $region12: #{tpu_custom_call.1} parent=1 // pred_region
      _
    $region13: #{tpu_custom_call.1} parent=1 // pred_fallthru
      _
    // Predicated region
    $region14: #{tpu_custom_call.1} parent=1 // pred_check
      _
    $region15: #{tpu_custom_call.1} parent=1 // pred_check_branch
      %22 = sbr.rel (0) target = $region17
    $region16: #{tpu_custom_call.1} parent=1 // pred_region
      _
    $region17: #{tpu_custom_call.1} parent=1 // pred_fallthru
      _
    // Predicated region
    $region18: #{tpu_custom_call.1} parent=1 // pred_check
      _
    $region19: #{tpu_custom_call.1} parent=1 // pred_check_branch
      %24 = sbr.rel (0) target = $region21
    $region20: #{tpu_custom_call.1} parent=1 // pred_region
      _
    $region21: #{tpu_custom_call.1} parent=1 // pred_fallthru
      _
    // Predicated region
    $region22: #{tpu_custom_call.1} parent=1 // pred_check
      _
    $region23: #{tpu_custom_call.1} parent=1 // pred_check_branch
      %26 = sbr.rel (0) target = $region25
    $region24: #{tpu_custom_call.1} parent=1 // pred_region
      _
    $region25: #{tpu_custom_call.1} parent=1 // pred_fallthru
      _
    // Predicated region
    $region26: #{tpu_custom_call.1} parent=1 // pred_check
      _
    $region27: #{tpu_custom_call.1} parent=1 // pred_check_branch
      %28 = sbr.rel (0) target = $region29
    $region28: #{tpu_custom_call.1} parent=1 // pred_region
      _
    $region29: #{tpu_custom_call.1} parent=1 // pred_fallthru
      _
    // Predicated region
    $region30: #{tpu_custom_call.1} parent=1 // pred_check
      _
    $region31: #{tpu_custom_call.1} parent=1 // pred_check_branch
      %30 = sbr.rel (0) target = $region33
    $region32: #{tpu_custom_call.1} parent=1 // pred_region
      _
    $region33: #{tpu_custom_call.1} parent=1 // pred_fallthru
      _
    // Predicated region
    $region34: #{tpu_custom_call.1} parent=1 // pred_check
      _
    $region35: #{tpu_custom_call.1} parent=1 // pred_check_branch
      %32 = sbr.rel (0) target = $region37
    $region36: #{tpu_custom_call.1} parent=1 // pred_region
      _
    $region37: #{tpu_custom_call.1} parent=1 // pred_fallthru
      _
    %v34 = vld [vmem:[%s0] sm:$0xff]
    %v35 = vld [vmem:[%s0 + $0x8] sm:$0xff]
    %v36 = vld [vmem:[%s0 + $0x10] sm:$0xff]
    %v37 = vld [vmem:[%s0 + $0x18] sm:$0xff]
    %v38 = vld [vmem:[%s0 + $0x20] sm:$0xff]
    %v39 = vld [vmem:[%s0 + $0x28] sm:$0xff]
    %v40 = vld [vmem:[%s0 + $0x30] sm:$0xff]
    %v41 = vld [vmem:[%s0 + $0x38] sm:$0xff]
    %v42 = vld [vmem:[%s0 + $0x40] sm:$0xff]
    %v43 = vld [vmem:[%s0 + $0x48] sm:$0xff]
    %v44 = vld [vmem:[%s0 + $0x50] sm:$0xff]
    %v45 = vld [vmem:[%s0 + $0x58] sm:$0xff]
    %v46 = vld [vmem:[%s0 + $0x60] sm:$0xf]
    %v47 = vpack.c.bf16 %v35, %v34
    %v48 = vpack.c.bf16 %v37, %v36
    %v49 = vpack.c.bf16 %v39, %v38
    %v50 = vpack.c.bf16 %v41, %v40
    %v51 = vpack.c.bf16 %v43, %v42
    %v52 = vpack.c.bf16 %v45, %v44
    %v53 = vpack.c.bf16 %v46, %v46
    %v54 = vld [vmem:[%s2] sm:$0xf]
    %v55 = vld [vmem:[%s2 + $0x4] sm:$0xf]
    %v56 = vld [vmem:[%s2 + $0x8] sm:$0xf]
    %v57 = vld [vmem:[%s2 + $0xc] sm:$0xf]
    %v58 = vld [vmem:[%s1] sm:$0xff]
    %v59 = vld [vmem:[%s1 + $0x8] sm:$0xff]
    %v60 = vld [vmem:[%s1 + $0x10] sm:$0xff]
    %v61 = vld [vmem:[%s1 + $0x18] sm:$0xff]
    %v62 = vld [vmem:[%s1 + $0x20] sm:$0xff]
    %v63 = vld [vmem:[%s1 + $0x28] sm:$0xff]
    %v64 = vld [vmem:[%s1 + $0x30] sm:$0xff]
    %v65 = vld [vmem:[%s1 + $0x38] sm:$0xff]
    %v66 = vld [vmem:[%s1 + $0x40] sm:$0xff]
    %v67 = vld [vmem:[%s1 + $0x48] sm:$0xff]
    %v68 = vld [vmem:[%s1 + $0x50] sm:$0xff]
    %v69 = vld [vmem:[%s1 + $0x58] sm:$0xff]
    %v70 = vld [vmem:[%s1 + $0x60] sm:$0xf]
    %v71 = vpack.c.bf16 %v59, %v58
    %v72 = vpack.c.bf16 %v61, %v60
    %v73 = vpack.c.bf16 %v63, %v62
    %v74 = vpack.c.bf16 %v65, %v64
    %v75 = vpack.c.bf16 %v67, %v66
    %v76 = vpack.c.bf16 %v69, %v68
    %v77 = vpack.c.bf16 %v70, %v70
    %v78 = vld [vmem:[%s3] sm:$0xf]
    %vm79 = vcmask 64512
    %v81 = vsel %vm79, %v71, 0
    %v84 = vsel %vm79, %v72, 0
    %v87 = vsel %vm79, %v73, 0
    %v90 = vsel %vm79, %v74, 0
    %v93 = vsel %vm79, %v75, 0
    %v96 = vsel %vm79, %v76, 0
    %v99 = vsel %vm79, %v77, 0
    %vm101 = vcmask 1043456
    %v103 = vsel %vm101, %v78, 0
    %105 = vmatprep.subr.bf16.mxu0 0
    %106 = vmatpush1.bf16.msra.mxu0 %v103
    %107 = vmatprep.subr.bf16.mxu0 0
    %108 = vmatpush1.bf16.msra.mxu0 0
    %109 = vmatprep.subr.bf16.mxu0 0
    %110 = vmatpush1.bf16.msra.mxu0 0
    %111 = vmatprep.subr.bf16.mxu0 0
    %112 = vmatpush1.bf16.msra.mxu0 0
    %113 = vmatprep.subr.bf16.mxu0 0
    %114 = vmatpush1.bf16.msra.mxu0 0
    %115 = vmatprep.subr.bf16.mxu0 0
    %116 = vmatpush1.bf16.msra.mxu0 0
    %117 = vmatprep.subr.bf16.mxu0 0
    %118 = vmatpush1.bf16.msra.mxu0 0
    %119 = vmatprep.subr.bf16.mxu0 0
    %120 = vmatpush1.bf16.msra.mxu0 0
    %121 = vmatprep.subr.bf16.mxu0 0
    %122 = vmatpush1.bf16.msra.mxu0 0
    %123 = vmatprep.subr.bf16.mxu0 0
    %124 = vmatpush1.bf16.msra.mxu0 0
    %125 = vmatprep.subr.bf16.mxu0 0
    %126 = vmatpush1.bf16.msra.mxu0 0
    %127 = vmatprep.subr.bf16.mxu0 0
    %128 = vmatpush1.bf16.msra.mxu0 0
    %129 = vmatprep.subr.bf16.mxu0 0
    %130 = vmatpush1.bf16.msra.mxu0 0
    %131 = vmatprep.subr.bf16.mxu0 0
    %132 = vmatpush1.bf16.msra.mxu0 0
    %133 = vmatprep.subr.bf16.mxu0 0
    %134 = vmatpush1.bf16.msra.mxu0 0
    %135 = vmatprep.subr.bf16.mxu0 0
    %136 = vmatpush1.bf16.msra.mxu0 0
    %137 = vmatprep.mubr.bf16.mxu0 0
    %138 = vmatmul.mubr.bf16.gmra.mrb[0].mxu0 %v81
    %v139 = vpop.f32.mrb[0].mxu0
    %v140 = vadd.f32 0.0, %v139
    %v141 = vpop.f32.mrb[0].mxu0
    %v142 = vpop.f32.mrb[0].mxu0
    %v143 = vadd.f32 0.0, %v142
    %v144 = vpop.f32.mrb[0].mxu0
    %145 = vmatprep.mubr.bf16.mxu0 0
    %146 = vmatmul.mubr.bf16.gmra.mrb[0].mxu0 %v84
    %v147 = vpop.f32.mrb[0].mxu0
    %v148 = vadd.f32 0.0, %v147
    %v149 = vpop.f32.mrb[0].mxu0
    %v150 = vpop.f32.mrb[0].mxu0
    %v151 = vadd.f32 0.0, %v150
    %v152 = vpop.f32.mrb[0].mxu0
    %153 = vmatprep.mubr.bf16.mxu0 0
    %154 = vmatmul.mubr.bf16.gmra.mrb[0].mxu0 %v87
    %v155 = vpop.f32.mrb[0].mxu0
    %v156 = vadd.f32 0.0, %v155
    %v157 = vpop.f32.mrb[0].mxu0
    %v158 = vpop.f32.mrb[0].mxu0
    %v159 = vadd.f32 0.0, %v158
    %v160 = vpop.f32.mrb[0].mxu0
    %161 = vmatprep.mubr.bf16.mxu0 0
    %162 = vmatmul.mubr.bf16.gmra.mrb[0].mxu0 %v90
    %v163 = vpop.f32.mrb[0].mxu0
    %v164 = vadd.f32 0.0, %v163
    %v165 = vpop.f32.mrb[0].mxu0
    %v166 = vpop.f32.mrb[0].mxu0
    %v167 = vadd.f32 0.0, %v166
    %v168 = vpop.f32.mrb[0].mxu0
    %169 = vmatprep.mubr.bf16.mxu0 0
    %170 = vmatmul.mubr.bf16.gmra.mrb[0].mxu0 %v93
    %v171 = vpop.f32.mrb[0].mxu0
    %v172 = vadd.f32 0.0, %v171
    %v173 = vpop.f32.mrb[0].mxu0
    %v174 = vpop.f32.mrb[0].mxu0
    %v175 = vadd.f32 0.0, %v174
    %v176 = vpop.f32.mrb[0].mxu0
    %177 = vmatprep.mubr.bf16.mxu0 0
    %178 = vmatmul.mubr.bf16.gmra.mrb[0].mxu0 %v96
    %v179 = vpop.f32.mrb[0].mxu0
    %v180 = vadd.f32 0.0, %v179
    %v181 = vpop.f32.mrb[0].mxu0
    %v182 = vpop.f32.mrb[0].mxu0
    %v183 = vadd.f32 0.0, %v182
    %v184 = vpop.f32.mrb[0].mxu0
    %185 = vmatprep.mubr.bf16.mxu0 0
    %186 = vmatmul.mubr.bf16.gmra.mrb[0].mxu0 %v99
    %v187 = vpop.f32.mrb[0].mxu0
    %v188 = vadd.f32 0.0, %v187
    %v189 = vpop.f32.mrb[0].mxu0
    %v190 = vpop.f32.mrb[0].mxu0
    %v191 = vpop.f32.mrb[0].mxu0
    %192 = vdwg.mxu0
    %v197 = vunpack.c.l.b16 %v54
    %v198 = vunpack.c.l.b16 %v55
    %v199 = vunpack.c.l.b16 %v56
    %v200 = vunpack.c.l.b16 %v57
    %v201 = vpack.c.b16 %v198, %v197
    %v202 = vpack.c.b16 %v200, %v199
    %vm205 = vcmask 261120
    %v207 = vsel %vm205, %v47, 0
    %v210 = vsel %vm205, %v48, 0
    %v213 = vsel %vm205, %v49, 0
    %v216 = vsel %vm205, %v50, 0
    %v219 = vsel %vm205, %v51, 0
    %v222 = vsel %vm205, %v52, 0
    %v225 = vsel %vm205, %v53, 0
    %227 = vmatprep.subr.bf16.mxu0 0
    %228 = vmatpush1.bf16.msra.mxu0 %v201
    %229 = vmatprep.subr.bf16.mxu0 0
    %230 = vmatpush1.bf16.msra.mxu0 %v202
    %231 = vmatprep.subr.bf16.mxu0 0
    %232 = vmatpush1.bf16.msra.mxu0 0
    %233 = vmatprep.subr.bf16.mxu0 0
    %234 = vmatpush1.bf16.msra.mxu0 0
    %235 = vmatprep.subr.bf16.mxu0 0
    %236 = vmatpush1.bf16.msra.mxu0 0
    %237 = vmatprep.subr.bf16.mxu0 0
    %238 = vmatpush1.bf16.msra.mxu0 0
    %239 = vmatprep.subr.bf16.mxu0 0
    %240 = vmatpush1.bf16.msra.mxu0 0
    %241 = vmatprep.subr.bf16.mxu0 0
    %242 = vmatpush1.bf16.msra.mxu0 0
    %243 = vmatprep.subr.bf16.mxu0 0
    %244 = vmatpush1.bf16.msra.mxu0 0
    %245 = vmatprep.subr.bf16.mxu0 0
    %246 = vmatpush1.bf16.msra.mxu0 0
    %247 = vmatprep.subr.bf16.mxu0 0
    %248 = vmatpush1.bf16.msra.mxu0 0
    %249 = vmatprep.subr.bf16.mxu0 0
    %250 = vmatpush1.bf16.msra.mxu0 0
    %251 = vmatprep.subr.bf16.mxu0 0
    %252 = vmatpush1.bf16.msra.mxu0 0
    %253 = vmatprep.subr.bf16.mxu0 0
    %254 = vmatpush1.bf16.msra.mxu0 0
    %255 = vmatprep.subr.bf16.mxu0 0
    %256 = vmatpush1.bf16.msra.mxu0 0
    %257 = vmatprep.subr.bf16.mxu0 0
    %258 = vmatpush1.bf16.msra.mxu0 0
    %259 = vmatprep.mubr.bf16.mxu0 0
    %260 = vmatmul.mubr.bf16.gmra.mrb[0].mxu0 %v207
    %v261 = vpop.f32.mrb[0].mxu0
    %v262 = vadd.f32 %v140, %v261
    %v263 = vpop.f32.mrb[0].mxu0
    %v264 = vpop.f32.mrb[0].mxu0
    %v265 = vadd.f32 %v143, %v264
    %v266 = vpop.f32.mrb[0].mxu0
    %267 = vmatprep.mubr.bf16.mxu0 0
    %268 = vmatmul.mubr.bf16.gmra.mrb[0].mxu0 %v210
    %v269 = vpop.f32.mrb[0].mxu0
    %v270 = vadd.f32 %v148, %v269
    %v271 = vpop.f32.mrb[0].mxu0
    %v272 = vpop.f32.mrb[0].mxu0
    %v273 = vadd.f32 %v151, %v272
    %v274 = vpop.f32.mrb[0].mxu0
    %275 = vmatprep.mubr.bf16.mxu0 0
    %276 = vmatmul.mubr.bf16.gmra.mrb[0].mxu0 %v213
    %v277 = vpop.f32.mrb[0].mxu0
    %v278 = vadd.f32 %v156, %v277
    %v279 = vpop.f32.mrb[0].mxu0
    %v280 = vpop.f32.mrb[0].mxu0
    %v281 = vadd.f32 %v159, %v280
    %v282 = vpop.f32.mrb[0].mxu0
    %283 = vmatprep.mubr.bf16.mxu0 0
    %284 = vmatmul.mubr.bf16.gmra.mrb[0].mxu0 %v216
    %v285 = vpop.f32.mrb[0].mxu0
    %v286 = vadd.f32 %v164, %v285
    %v287 = vpop.f32.mrb[0].mxu0
    %v288 = vpop.f32.mrb[0].mxu0
    %v289 = vadd.f32 %v167, %v288
    %v290 = vpop.f32.mrb[0].mxu0
    %291 = vmatprep.mubr.bf16.mxu0 0
    %292 = vmatmul.mubr.bf16.gmra.mrb[0].mxu0 %v219
    %v293 = vpop.f32.mrb[0].mxu0
    %v294 = vadd.f32 %v172, %v293
    %v295 = vpop.f32.mrb[0].mxu0
    %v296 = vpop.f32.mrb[0].mxu0
    %v297 = vadd.f32 %v175, %v296
    %v298 = vpop.f32.mrb[0].mxu0
    %299 = vmatprep.mubr.bf16.mxu0 0
    %300 = vmatmul.mubr.bf16.gmra.mrb[0].mxu0 %v222
    %v301 = vpop.f32.mrb[0].mxu0
    %v302 = vadd.f32 %v180, %v301
    %v303 = vpop.f32.mrb[0].mxu0
    %v304 = vpop.f32.mrb[0].mxu0
    %v305 = vadd.f32 %v183, %v304
    %v306 = vpop.f32.mrb[0].mxu0
    %307 = vmatprep.mubr.bf16.mxu0 0
    %308 = vmatmul.mubr.bf16.gmra.mrb[0].mxu0 %v225
    %v309 = vpop.f32.mrb[0].mxu0
    %v310 = vadd.f32 %v188, %v309
    %v311 = vpop.f32.mrb[0].mxu0
    %v312 = vpop.f32.mrb[0].mxu0
    %v313 = vpop.f32.mrb[0].mxu0
    %314 = vdwg.mxu0
    %v315 = vld [vmem:[%s4] sm:$0x1]
    %v317 = vlaneseq
    %v318 = vshrl.u32 %v317, 7
    %v319 = vsub.s32 0, %v318
    %v320 = vrot.slane %v315, %v319
    %v322 = vadd.f32 %v262, %v320
    %v323 = vadd.f32 %v265, %v320
    %v324 = vadd.f32 %v270, %v320
    %v325 = vadd.f32 %v273, %v320
    %v326 = vadd.f32 %v278, %v320
    %v327 = vadd.f32 %v281, %v320
    %v328 = vadd.f32 %v286, %v320
    %v329 = vadd.f32 %v289, %v320
    %v330 = vadd.f32 %v294, %v320
    %v331 = vadd.f32 %v297, %v320
    %v332 = vadd.f32 %v302, %v320
    %v333 = vadd.f32 %v305, %v320
    %v334 = vadd.f32 %v310, %v320
    %v335 = vmax.f32 %v322, 0.0
    %v336 = vmax.f32 %v323, 0.0
    %v337 = vmax.f32 %v324, 0.0
    %v338 = vmax.f32 %v325, 0.0
    %v339 = vmax.f32 %v326, 0.0
    %v340 = vmax.f32 %v327, 0.0
    %v341 = vmax.f32 %v328, 0.0
    %v342 = vmax.f32 %v329, 0.0
    %v343 = vmax.f32 %v330, 0.0
    %v344 = vmax.f32 %v331, 0.0
    %v345 = vmax.f32 %v332, 0.0
    %v346 = vmax.f32 %v333, 0.0
    %v347 = vmax.f32 %v334, 0.0
    %v348 = vld [vmem:[%s5] sm:$0xf]
    %v349 = vld [vmem:[%s5 + $0x4] sm:$0xf]
    %v350 = vld [vmem:[%s5 + $0x8] sm:$0xf]
    %v351 = vld [vmem:[%s5 + $0xc] sm:$0xf]
    %v352 = vld [vmem:[%s5 + $0x10] sm:$0xf]
    %v353 = vld [vmem:[%s5 + $0x14] sm:$0xf]
    %v354 = vld [vmem:[%s5 + $0x18] sm:$0xf]
    %v355 = vld [vmem:[%s5 + $0x1c] sm:$0xf]
    %v356 = vld [vmem:[%s5 + $0x20] sm:$0xf]
    %v357 = vld [vmem:[%s5 + $0x24] sm:$0xf]
    %v358 = vld [vmem:[%s5 + $0x28] sm:$0xf]
    %v359 = vld [vmem:[%s5 + $0x2c] sm:$0xf]
    %v360 = vld [vmem:[%s5 + $0x30] sm:$0xf]
    %v361 = vld [vmem:[%s5 + $0x34] sm:$0xf]
    %v362 = vld [vmem:[%s5 + $0x38] sm:$0xf]
    %v363 = vld [vmem:[%s5 + $0x3c] sm:$0xf]
    %v364 = vld [vmem:[%s6] sm:$0x1]
    %v365 = vpack.c.bf16 %v336, %v335
    %v366 = vpack.c.bf16 %v338, %v337
    %v367 = vpack.c.bf16 %v340, %v339
    %v368 = vpack.c.bf16 %v342, %v341
    %v369 = vpack.c.bf16 %v344, %v343
    %v370 = vpack.c.bf16 %v346, %v345
    %v371 = vpack.c.bf16 %v347, %v347
    %v373 = vlaneseq
    %v374 = vshrl.u32 %v373, 7
    %v375 = vsub.s32 0, %v374
    %v376 = vrot.slane %v364, %v375
    %v394 = vunpack.c.l.b16 %v348
    %v395 = vunpack.c.l.b16 %v349
    %v396 = vunpack.c.l.b16 %v350
    %v397 = vunpack.c.l.b16 %v351
    %v398 = vunpack.c.l.b16 %v352
    %v399 = vunpack.c.l.b16 %v353
    %v400 = vunpack.c.l.b16 %v354
    %v401 = vunpack.c.l.b16 %v355
    %v402 = vunpack.c.l.b16 %v356
    %v403 = vunpack.c.l.b16 %v357
    %v404 = vunpack.c.l.b16 %v358
    %v405 = vunpack.c.l.b16 %v359
    %v406 = vunpack.c.l.b16 %v360
    %v407 = vunpack.c.l.b16 %v361
    %v408 = vunpack.c.l.b16 %v362
    %v409 = vunpack.c.l.b16 %v363
    %v410 = vpack.c.b16 %v395, %v394
    %v411 = vpack.c.b16 %v397, %v396
    %v412 = vpack.c.b16 %v399, %v398
    %v413 = vpack.c.b16 %v401, %v400
    %v414 = vpack.c.b16 %v403, %v402
    %v415 = vpack.c.b16 %v405, %v404
    %v416 = vpack.c.b16 %v407, %v406
    %v417 = vpack.c.b16 %v409, %v408
    %426 = vmatprep.subr.bf16.mxu0 0
    %427 = vmatpush1.bf16.msra.mxu0 %v410
    %428 = vmatprep.subr.bf16.mxu0 0
    %429 = vmatpush1.bf16.msra.mxu0 %v411
    %430 = vmatprep.subr.bf16.mxu0 0
    %431 = vmatpush1.bf16.msra.mxu0 %v412
    %432 = vmatprep.subr.bf16.mxu0 0
    %433 = vmatpush1.bf16.msra.mxu0 %v413
    %434 = vmatprep.subr.bf16.mxu0 0
    %435 = vmatpush1.bf16.msra.mxu0 %v414
    %436 = vmatprep.subr.bf16.mxu0 0
    %437 = vmatpush1.bf16.msra.mxu0 %v415
    %438 = vmatprep.subr.bf16.mxu0 0
    %439 = vmatpush1.bf16.msra.mxu0 %v416
    %440 = vmatprep.subr.bf16.mxu0 0
    %441 = vmatpush1.bf16.msra.mxu0 %v417
    %442 = vmatprep.subr.bf16.mxu0 0
    %443 = vmatpush1.bf16.msra.mxu0 0
    %444 = vmatprep.subr.bf16.mxu0 0
    %445 = vmatpush1.bf16.msra.mxu0 0
    %446 = vmatprep.subr.bf16.mxu0 0
    %447 = vmatpush1.bf16.msra.mxu0 0
    %448 = vmatprep.subr.bf16.mxu0 0
    %449 = vmatpush1.bf16.msra.mxu0 0
    %450 = vmatprep.subr.bf16.mxu0 0
    %451 = vmatpush1.bf16.msra.mxu0 0
    %452 = vmatprep.subr.bf16.mxu0 0
    %453 = vmatpush1.bf16.msra.mxu0 0
    %454 = vmatprep.subr.bf16.mxu0 0
    %455 = vmatpush1.bf16.msra.mxu0 0
    %456 = vmatprep.subr.bf16.mxu0 0
    %457 = vmatpush1.bf16.msra.mxu0 0
    %458 = vmatprep.mubr.bf16.mxu0 0
    %459 = vmatmul.mubr.bf16.gmra.mrb[0].mxu0 %v365
    %v460 = vpop.f32.mrb[0].mxu0
    %v461 = vadd.f32 %v376, %v460
    %v462 = vpop.f32.mrb[0].mxu0
    %v463 = vpop.f32.mrb[0].mxu0
    %v464 = vadd.f32 %v376, %v463
    %v465 = vpop.f32.mrb[0].mxu0
    %466 = vmatprep.mubr.bf16.mxu0 0
    %467 = vmatmul.mubr.bf16.gmra.mrb[0].mxu0 %v366
    %v468 = vpop.f32.mrb[0].mxu0
    %v469 = vadd.f32 %v376, %v468
    %v470 = vpop.f32.mrb[0].mxu0
    %v471 = vpop.f32.mrb[0].mxu0
    %v472 = vadd.f32 %v376, %v471
    %v473 = vpop.f32.mrb[0].mxu0
    %474 = vmatprep.mubr.bf16.mxu0 0
    %475 = vmatmul.mubr.bf16.gmra.mrb[0].mxu0 %v367
    %v476 = vpop.f32.mrb[0].mxu0
    %v477 = vadd.f32 %v376, %v476
    %v478 = vpop.f32.mrb[0].mxu0
    %v479 = vpop.f32.mrb[0].mxu0
    %v480 = vadd.f32 %v376, %v479
    %v481 = vpop.f32.mrb[0].mxu0
    %482 = vmatprep.mubr.bf16.mxu0 0
    %483 = vmatmul.mubr.bf16.gmra.mrb[0].mxu0 %v368
    %v484 = vpop.f32.mrb[0].mxu0
    %v485 = vadd.f32 %v376, %v484
    %v486 = vpop.f32.mrb[0].mxu0
    %v487 = vpop.f32.mrb[0].mxu0
    %v488 = vadd.f32 %v376, %v487
    %v489 = vpop.f32.mrb[0].mxu0
    %490 = vmatprep.mubr.bf16.mxu0 0
    %491 = vmatmul.mubr.bf16.gmra.mrb[0].mxu0 %v369
    %v492 = vpop.f32.mrb[0].mxu0
    %v493 = vadd.f32 %v376, %v492
    %v494 = vpop.f32.mrb[0].mxu0
    %v495 = vpop.f32.mrb[0].mxu0
    %v496 = vadd.f32 %v376, %v495
    %v497 = vpop.f32.mrb[0].mxu0
    %498 = vmatprep.mubr.bf16.mxu0 0
    %499 = vmatmul.mubr.bf16.gmra.mrb[0].mxu0 %v370
    %v500 = vpop.f32.mrb[0].mxu0
    %v501 = vadd.f32 %v376, %v500
    %v502 = vpop.f32.mrb[0].mxu0
    %v503 = vpop.f32.mrb[0].mxu0
    %v504 = vadd.f32 %v376, %v503
    %v505 = vpop.f32.mrb[0].mxu0
    %506 = vmatprep.mubr.bf16.mxu0 0
    %507 = vmatmul.mubr.bf16.gmra.mrb[0].mxu0 %v371
    %v508 = vpop.f32.mrb[0].mxu0
    %v509 = vadd.f32 %v376, %v508
    %v510 = vpop.f32.mrb[0].mxu0
    %v511 = vpop.f32.mrb[0].mxu0
    %v512 = vpop.f32.mrb[0].mxu0
    %513 = vdwg.mxu0
    %v514 = vmax.f32 %v461, 0.0
    %v515 = vmax.f32 %v464, 0.0
    %v516 = vmax.f32 %v469, 0.0
    %v517 = vmax.f32 %v472, 0.0
    %v518 = vmax.f32 %v477, 0.0
    %v519 = vmax.f32 %v480, 0.0
    %v520 = vmax.f32 %v485, 0.0
    %v521 = vmax.f32 %v488, 0.0
    %v522 = vmax.f32 %v493, 0.0
    %v523 = vmax.f32 %v496, 0.0
    %v524 = vmax.f32 %v501, 0.0
    %v525 = vmax.f32 %v504, 0.0
    %v526 = vmax.f32 %v509, 0.0
    %v527 = vld [vmem:[%s7] sm:$0x1]
    %v528 = vpack.c.bf16 %v515, %v514
    %v529 = vpack.c.bf16 %v517, %v516
    %v530 = vpack.c.bf16 %v519, %v518
    %v531 = vpack.c.bf16 %v521, %v520
    %v532 = vpack.c.bf16 %v523, %v522
    %v533 = vpack.c.bf16 %v525, %v524
    %v534 = vpack.c.bf16 %v526, %v526
    %v535 = vld [vmem:[%s8] sm:$0x3]
    %537 = vset.pattern.permute.xlu0 0
    %538 = vperm.xlu0 %537, %v535
    %v539 = vpop.permute.xlu0 %538
    %541 = vmatprep.subr.bf16.mxu0 0
    %542 = vmatpush1.bf16.xpose.msra.mxu0 %v528
    %543 = vmatprep.subr.bf16.mxu0 0
    %544 = vmatpush1.bf16.xpose.msra.mxu0 %v529
    %545 = vmatprep.subr.bf16.mxu0 0
    %546 = vmatpush1.bf16.xpose.msra.mxu0 %v530
    %547 = vmatprep.subr.bf16.mxu0 0
    %548 = vmatpush1.bf16.xpose.msra.mxu0 %v531
    %549 = vmatprep.subr.bf16.mxu0 0
    %550 = vmatpush1.bf16.xpose.msra.mxu0 %v532
    %551 = vmatprep.subr.bf16.mxu0 0
    %552 = vmatpush1.bf16.xpose.msra.mxu0 %v533
    %553 = vmatprep.subr.bf16.mxu0 0
    %554 = vmatpush1.bf16.xpose.msra.mxu0 %v534
    %555 = vmatprep.subr.bf16.mxu0 0
    %556 = vmatpush1.bf16.xpose.msra.mxu0 0
    %557 = vmatprep.subr.bf16.mxu0 0
    %558 = vmatpush1.bf16.xpose.msra.mxu0 0
    %559 = vmatprep.subr.bf16.mxu0 0
    %560 = vmatpush1.bf16.xpose.msra.mxu0 0
    %561 = vmatprep.subr.bf16.mxu0 0
    %562 = vmatpush1.bf16.xpose.msra.mxu0 0
    %563 = vmatprep.subr.bf16.mxu0 0
    %564 = vmatpush1.bf16.xpose.msra.mxu0 0
    %565 = vmatprep.subr.bf16.mxu0 0
    %566 = vmatpush1.bf16.xpose.msra.mxu0 0
    %567 = vmatprep.subr.bf16.mxu0 0
    %568 = vmatpush1.bf16.xpose.msra.mxu0 0
    %569 = vmatprep.subr.bf16.mxu0 0
    %570 = vmatpush1.bf16.xpose.msra.mxu0 0
    %571 = vmatprep.subr.bf16.mxu0 0
    %572 = vmatpush1.bf16.xpose.msra.mxu0 0
    %573 = vmatprep.mubr.bf16.mxu0 0
    %574 = vmatmul.mubr.bf16.gmra.mrb[0].mxu0 %v527
    %v575 = vpop.f32.mrb[0].mxu0
    %v576 = vadd.f32 %v539, %v575
    %v577 = vpop.f32.mrb[0].mxu0
    %v578 = vpop.f32.mrb[0].mxu0
    %v579 = vpop.f32.mrb[0].mxu0
    %580 = vdwg.mxu0
    %vm581 = vcmask 812032
    %582 = vst.msk [vmem:[#allocation2] sm:$0x3] %vm581, %v576
    // Predicated region
    $region38: #{tpu_custom_call.1} parent=1 // pred_check
      _
    $region39: #{tpu_custom_call.1} parent=1 // pred_check_branch
      %584 = sbr.rel (0) target = $region41
    $region40: #{tpu_custom_call.1} parent=1 // pred_region
      %s586 = ssub.s32 32, 32
      %587 = vsyncadd [#allocation3], %s586
      %s589 = sshll.u32 [#allocation2], 4
      %s590 = int_to_ptr.vmem [resolvable:$true] %s589
      %592 = dma.vmem_to_hbm [thread:$0]  %s590, 32, %s9, [#allocation3]
    $region41: #{tpu_custom_call.1} parent=1 // pred_fallthru
      _
    // Predicated region
    $region42: #{tpu_custom_call.1} parent=1 // pred_check
      _
    $region43: #{tpu_custom_call.1} parent=1 // pred_check_branch
      %594 = sbr.rel (0) target = $region45
    $region44: #{tpu_custom_call.1} parent=1 // pred_region
      %595 = dma.done [#allocation3], 32
    $region45: #{tpu_custom_call.1} parent=1 // pred_fallthru
      _
    %596 = vsyncpa [#allocation3], 1

</llo_original>
